<compile_context>
chip_gen: v7x
topology: tpu7x:2x2x1
jax: 0.10.0
libtpu: 0.0.40
codegen_flags: <defaults>
</compile_context>

<pallas_src>
import jax
import jax.numpy as jnp
from jax.experimental import pallas as pl
from jax.experimental.pallas import tpu as pltpu


def _round_up(x, m):
    return (x + m - 1) // m * m


def _cdiv(a, b):
    return -(-a // b)


def _chip_vmem_bytes():
    """Physical VMEM of the current TPU (fallback: conservative 64 MiB)."""
    try:
        info = pltpu.get_tpu_info()
        v = getattr(info, "vmem_capacity_bytes", None)
        if v:
            return int(v)
    except Exception:
        pass
    return 64 * 1024 * 1024


# ----------------------------- kernel ---------------------------------------


def _ffn_kernel(x_ref, w1_ref, b1_ref, w2_ref, b2_ref, o_ref, acc_ref):
    # Grid: (i over token tiles [parallel], k over d_ff tiles [arbitrary]).
    # x_ref:  (tm, E_pad)     f32 token tile (same block for all k -> DMA'd once per i)
    # w1_ref: (E_pad, t_dff)  bf16 slice of linear_1 weight
    # b1_ref: (1, t_dff)      f32 slice of linear_1 bias
    # w2_ref: (t_dff, E_pad)  bf16 slice of linear_2 weight
    # b2_ref: (1, E_pad)      f32 linear_2 bias
    # o_ref:  (tm, E_pad)     output tile (written once, at the last k)
    # acc_ref:(tm, E_pad)     f32 accumulator scratch
    k = pl.program_id(1)

    # Cast activations to the MXU compute dtype in-kernel (hides under the MXU).
    x_bf = x_ref[...].astype(w1_ref.dtype)

    # linear_1 (d_ff slice) + bias + ReLU, f32 accumulation on the MXU.
    h = jnp.dot(x_bf, w1_ref[...], preferred_element_type=jnp.float32)
    h = jnp.maximum(h + b1_ref[...], 0.0)

    # dropout: identity at inference (eval() semantics).
    # TODO(synk): training-mode dropout would need pltpu.prng_seed/prng_random_bits masking.

    # Partial linear_2 over this d_ff slice (ReLU intermediate truncated to bf16).
    partial = jnp.dot(h.astype(w2_ref.dtype), w2_ref[...],
                      preferred_element_type=jnp.float32)

    @pl.when(k == 0)
    def _():
        acc_ref[...] = partial          # write-through: no zero-init + read-add

    @pl.when(k > 0)
    def _():
        acc_ref[...] += partial

    @pl.when(k == pl.num_programs(1) - 1)
    def _():
        o_ref[...] = (acc_ref[...] + b2_ref[...]).astype(o_ref.dtype)


# ------------------------- params preparation -------------------------------


def prepare_ffn_params(w1, b1, w2, b2, *, compute_dtype=jnp.bfloat16):
    """Pad/cast the weights ONCE (init-time, not per forward call).

    w1: (E, d_ff) == linear_1.weight.T, b1: (d_ff,),
    w2: (d_ff, E) == linear_2.weight.T, b2: (E,).

    Shapes are padded to multiples of 256 (full MXU column utilization on
    v6e/v7x, still 128-aligned for v5e).  Zero padding is numerically exact:
    padded rows/cols contribute nothing and are sliced away after the kernel.
    """
    E, d_ff = w1.shape
    assert w2.shape == (d_ff, E) and b1.shape == (d_ff,) and b2.shape == (E,)
    E_pad = _round_up(E, 256)
    d_pad = _round_up(d_ff, 256)
    w1p = jnp.pad(w1.astype(compute_dtype), ((0, E_pad - E), (0, d_pad - d_ff)))
    b1p = jnp.pad(b1.astype(jnp.float32), (0, d_pad - d_ff)).reshape(1, d_pad)
    w2p = jnp.pad(w2.astype(compute_dtype), ((0, d_pad - d_ff), (0, E_pad - E)))
    b2p = jnp.pad(b2.astype(jnp.float32), (0, E_pad - E)).reshape(1, E_pad)
    return {"w1": w1p, "b1": b1p, "w2": w2p, "b2": b2p,
            "E": E, "d_ff": d_ff, "E_pad": E_pad, "d_pad": d_pad}


# --------------------------- tile selection ----------------------------------


def _select_tiles(M, E_pad, d_pad, out_itemsize, vmem_cap):
    """Pick (tm, t_dff) from the chip's VMEM.

    Arithmetic intensity of the weight stream is ~tm flops/byte, so tm is
    maximized first; t_dff only amortizes per-grid-step overhead and must
    divide d_pad exactly (no dead d_ff columns).
    """
    budget = int(vmem_cap * 0.75)                  # headroom under vmem_limit

    def usage(tm, t_dff):
        return (2 * tm * E_pad * 4                 # x tile, f32, double-buffered
                + 2 * 2 * E_pad * t_dff * 2        # w1 + w2 slices, bf16, 2 buffers each
                + 2 * 8 * (t_dff + E_pad) * 4      # bias tiles (sublane-padded)
                + 2 * tm * E_pad * out_itemsize    # output tile, double-buffered
                + tm * E_pad * 4)                  # f32 accumulator scratch

    # t_dff candidates: multiples of 256 that divide d_pad exactly, capped.
    cands = [c for c in range(256, min(d_pad, 2048) + 1, 256) if d_pad % c == 0]
    if not cands:
        cands = [d_pad]
    t_min = cands[0]

    # Token-tile target: v5e/v6e (128 MiB VMEM) -> tm~1024 (MXU-bound on v6e);
    # v7x (64 MiB) -> tm~512 and >=2 tiles so both TensorCores get work.
    is_small_vmem = vmem_cap <= 80 * 1024 * 1024
    tm_target = 512 if is_small_vmem else 1024
    tm = min(tm_target, _round_up(M, 16))
    if is_small_vmem and M >= 256:
        tm = min(tm, _round_up(_cdiv(M, 2), 16))   # feed both v7x TensorCores

    while tm > 16 and usage(tm, t_min) > budget:
        tm = max(16, _round_up(tm // 2, 16))

    t_dff = t_min
    for c in cands:
        if usage(tm, c) <= budget:
            t_dff = max(t_dff, c)
    return tm, t_dff


# ------------------------------ wrapper ---------------------------------------


def feed_forward(x, params, *, out_dtype=None):
    """x: (B, S, E) float32.  params: dict from prepare_ffn_params()."""
    B, S, E = x.shape
    assert E == params["E"]
    E_pad, d_pad = params["E_pad"], params["d_pad"]
    if out_dtype is None:
        out_dtype = x.dtype        # pass jnp.bfloat16 to halve writeback bytes
    M = B * S

    vmem_cap = _chip_vmem_bytes()
    tm, t_dff = _select_tiles(M, E_pad, d_pad,
                              jnp.dtype(out_dtype).itemsize, vmem_cap)
    M_pad = _round_up(M, tm)

    # Only per-call data op outside the kernel: reshape (free) + zero-pad that
    # is skipped entirely when M and E are already tile-aligned.
    x2d = x.reshape(M, E)
    if M_pad != M or E_pad != E:
        x2d = jnp.pad(x2d, ((0, M_pad - M), (0, E_pad - E)))

    grid = (M_pad // tm, d_pad // t_dff)
    n_tiles_m = grid[0]
    w_itemsize = jnp.dtype(params["w1"].dtype).itemsize

    cost = pl.CostEstimate(
        flops=4 * M_pad * E_pad * d_pad,
        transcendentals=0,
        bytes_accessed=(
            M_pad * E_pad * jnp.dtype(x2d.dtype).itemsize
            + n_tiles_m * (params["w1"].size + params["w2"].size) * w_itemsize
            + (params["b1"].size + params["b2"].size) * 4
            + M_pad * E_pad * jnp.dtype(out_dtype).itemsize),
    )

    # NOTE: if profiling shows exposed weight DMA on v5e/v6e (small E), the
    # w1/w2 BlockSpecs can take pipeline_mode=pl.Buffered(3); skipped here to
    # preserve VMEM headroom for larger tm (especially on v7x).
    out2d = pl.pallas_call(
        _ffn_kernel,
        out_shape=jax.ShapeDtypeStruct((M_pad, E_pad), out_dtype),
        grid_spec=pltpu.PrefetchScalarGridSpec(
            num_scalar_prefetch=0,
            grid=grid,
            in_specs=[
                pl.BlockSpec((tm, E_pad), lambda i, k: (i, 0)),      # x tile
                pl.BlockSpec((E_pad, t_dff), lambda i, k: (0, k)),   # w1 slice
                pl.BlockSpec((1, t_dff), lambda i, k: (0, k)),       # b1 slice
                pl.BlockSpec((t_dff, E_pad), lambda i, k: (k, 0)),   # w2 slice
                pl.BlockSpec((1, E_pad), lambda i, k: (0, 0)),       # b2
            ],
            out_specs=pl.BlockSpec((tm, E_pad), lambda i, k: (i, 0)),
            scratch_shapes=[pltpu.VMEM((tm, E_pad), jnp.float32)],
        ),
        compiler_params=pltpu.CompilerParams(
            dimension_semantics=("parallel", "arbitrary"),
            vmem_limit_bytes=int(vmem_cap * 0.85),
        ),
        cost_estimate=cost,
    )(x2d, params["w1"], params["b1"], params["w2"], params["b2"])

    return out2d[:M, :E].reshape(B, S, E)


def init_params(key, embedding_size, d_ff):
    """Deterministic init mimicking nn.Linear (uniform +/- 1/sqrt(fan_in))."""
    k1, k2, k3, k4 = jax.random.split(key, 4)
    bound1 = 1.0 / (embedding_size ** 0.5)
    bound2 = 1.0 / (d_ff ** 0.5)
    # Stored pre-transposed: w1[E, d_ff] == linear_1.weight.T, w2[d_ff, E] == linear_2.weight.T
    w1 = jax.random.uniform(k1, (embedding_size, d_ff), jnp.float32, -bound1, bound1)
    b1 = jax.random.uniform(k2, (d_ff,), jnp.float32, -bound1, bound1)
    w2 = jax.random.uniform(k3, (d_ff, embedding_size), jnp.float32, -bound2, bound2)
    b2 = jax.random.uniform(k4, (embedding_size,), jnp.float32, -bound2, bound2)
    return w1, b1, w2, b2


if __name__ == "__main__":
    B, S, E, D_FF = 2, 8, 32, 128

    key = jax.random.PRNGKey(0)
    kx, kp = jax.random.split(key)
    x = jax.random.normal(kx, (B, S, E), jnp.float32)
    w1, b1, w2, b2 = init_params(kp, E, D_FF)

    params = prepare_ffn_params(w1, b1, w2, b2)     # one-time pad/cast (init-time)
    out = feed_forward(x, params)
    out = jax.block_until_ready(out)

    # Reference check (pure JAX, same bf16 compute path as the kernel).
    xr = x.reshape(-1, E).astype(jnp.bfloat16)
    h = jnp.dot(xr, w1.astype(jnp.bfloat16), preferred_element_type=jnp.float32) + b1
    h = jnp.maximum(h, 0.0).astype(jnp.bfloat16)
    ref = jnp.dot(h, w2.astype(jnp.bfloat16), preferred_element_type=jnp.float32) + b2
    ref = ref.reshape(B, S, E).astype(x.dtype)

    assert out.shape == (B, S, E)
    assert jnp.allclose(out, ref, atol=1e-2, rtol=1e-2), "mismatch vs reference"

    print("KERNEL_OK")
</pallas_src>

<mosaic_0001>
module attributes {stable_mosaic.version = 11 : i64} {
  func.func @_ffn_kernel(%arg0: i32, %arg1: i32, %arg2: memref<16x256xf32, #tpu.memory_space<vmem>>, %arg3: memref<256x256xbf16, #tpu.memory_space<vmem>>, %arg4: memref<1x256xf32, #tpu.memory_space<vmem>>, %arg5: memref<256x256xbf16, #tpu.memory_space<vmem>>, %arg6: memref<1x256xf32, #tpu.memory_space<vmem>>, %arg7: memref<16x256xf32, #tpu.memory_space<vmem>>, %arg8: memref<16x256xf32, #tpu.memory_space<vmem>>) attributes {dimension_semantics = [#tpu.dimension_semantics<parallel>, #tpu.dimension_semantics<arbitrary>], iteration_bounds = array<i64: 1, 1>, scalar_prefetch = 0 : i64, scratch_operands = 1 : i64, tpu.core_type = #tpu.core_type<tc>, window_params = [{transform_indices = @transform_0, window_bounds = array<i64: 16, 256>}, {transform_indices = @transform_1, window_bounds = array<i64: 256, 256>}, {transform_indices = @transform_2, window_bounds = array<i64: 1, 256>}, {transform_indices = @transform_3, window_bounds = array<i64: 256, 256>}, {pipeline_mode = #tpu.pipeline_mode<synchronous>, transform_indices = @transform_4, window_bounds = array<i64: 1, 256>}, {transform_indices = @transform_5, window_bounds = array<i64: 16, 256>}]} {
    %c0 = arith.constant 0 : index
    %c0_0 = arith.constant 0 : index
    %0 = vector.load %arg2[%c0, %c0_0] : memref<16x256xf32, #tpu.memory_space<vmem>>, vector<16x256xf32>
    %1 = arith.truncf %0 : vector<16x256xf32> to vector<16x256xbf16>
    %c0_1 = arith.constant 0 : index
    %c0_2 = arith.constant 0 : index
    %2 = vector.load %arg3[%c0_1, %c0_2] : memref<256x256xbf16, #tpu.memory_space<vmem>>, vector<256x256xbf16>
    %cst = arith.constant dense<0.000000e+00> : vector<16x256xf32>
    %3 = tpu.matmul %1, %2, %cst {dimension_numbers = #tpu.dot_dimension_numbers<[1], [0], [0], [1], [0, 0, 1, 1], [], []>} : vector<16x256xbf16>, vector<256x256xbf16>, vector<16x256xf32> -> vector<16x256xf32>
    %c0_3 = arith.constant 0 : index
    %c0_4 = arith.constant 0 : index
    %4 = vector.load %arg4[%c0_3, %c0_4] : memref<1x256xf32, #tpu.memory_space<vmem>>, vector<1x256xf32>
    %5 = vector.broadcast %4 : vector<1x256xf32> to vector<16x256xf32>
    %6 = arith.addf %3, %5 : vector<16x256xf32>
    %cst_5 = arith.constant 0.000000e+00 : f32
    %7 = vector.broadcast %cst_5 : f32 to vector<16x256xf32>
    %8 = arith.maximumf %6, %7 : vector<16x256xf32>
    %9 = arith.truncf %8 : vector<16x256xf32> to vector<16x256xbf16>
    %c0_6 = arith.constant 0 : index
    %c0_7 = arith.constant 0 : index
    %10 = vector.load %arg5[%c0_6, %c0_7] : memref<256x256xbf16, #tpu.memory_space<vmem>>, vector<256x256xbf16>
    %cst_8 = arith.constant dense<0.000000e+00> : vector<16x256xf32>
    %11 = tpu.matmul %9, %10, %cst_8 {dimension_numbers = #tpu.dot_dimension_numbers<[1], [0], [0], [1], [0, 0, 1, 1], [], []>} : vector<16x256xbf16>, vector<256x256xbf16>, vector<16x256xf32> -> vector<16x256xf32>
    %c0_i32 = arith.constant 0 : i32
    %12 = arith.cmpi eq, %arg1, %c0_i32 : i32
    %13 = arith.extui %12 : i1 to i32
    %c0_i32_9 = arith.constant 0 : i32
    %14 = arith.cmpi ne, %13, %c0_i32_9 : i32
    scf.if %14 {
      %c0_14 = arith.constant 0 : index
      %c0_15 = arith.constant 0 : index
      %21 = vector.load %arg8[%c0_14, %c0_15] : memref<16x256xf32, #tpu.memory_space<vmem>>, vector<16x256xf32>
      tpu.vector_store %arg8[%c0_14, %c0_15], %11 {strides = array<i32>} : memref<16x256xf32, #tpu.memory_space<vmem>>, vector<16x256xf32>,
    } else {
    }
    %c0_i32_10 = arith.constant 0 : i32
    %15 = arith.cmpi sgt, %arg1, %c0_i32_10 : i32
    %16 = arith.extui %15 : i1 to i32
    %c0_i32_11 = arith.constant 0 : i32
    %17 = arith.cmpi ne, %16, %c0_i32_11 : i32
    scf.if %17 {
      %c0_14 = arith.constant 0 : index
      %c0_15 = arith.constant 0 : index
      %21 = vector.load %arg8[%c0_14, %c0_15] : memref<16x256xf32, #tpu.memory_space<vmem>>, vector<16x256xf32>
      %22 = arith.addf %21, %11 : vector<16x256xf32>
      %c0_16 = arith.constant 0 : index
      %c0_17 = arith.constant 0 : index
      %23 = vector.load %arg8[%c0_16, %c0_17] : memref<16x256xf32, #tpu.memory_space<vmem>>, vector<16x256xf32>
      tpu.vector_store %arg8[%c0_16, %c0_17], %22 {strides = array<i32>} : memref<16x256xf32, #tpu.memory_space<vmem>>, vector<16x256xf32>,
    } else {
    }
    %c0_i32_12 = arith.constant 0 : i32
    %18 = arith.cmpi eq, %arg1, %c0_i32_12 : i32
    %19 = arith.extui %18 : i1 to i32
    %c0_i32_13 = arith.constant 0 : i32
    %20 = arith.cmpi ne, %19, %c0_i32_13 : i32
    scf.if %20 {
      %c0_14 = arith.constant 0 : index
      %c0_15 = arith.constant 0 : index
      %21 = vector.load %arg8[%c0_14, %c0_15] : memref<16x256xf32, #tpu.memory_space<vmem>>, vector<16x256xf32>
      %c0_16 = arith.constant 0 : index
      %c0_17 = arith.constant 0 : index
      %22 = vector.load %arg6[%c0_16, %c0_17] : memref<1x256xf32, #tpu.memory_space<vmem>>, vector<1x256xf32>
      %23 = vector.broadcast %22 : vector<1x256xf32> to vector<16x256xf32>
      %24 = arith.addf %21, %23 : vector<16x256xf32>
      %c0_18 = arith.constant 0 : index
      %c0_19 = arith.constant 0 : index
      %25 = vector.load %arg7[%c0_18, %c0_19] : memref<16x256xf32, #tpu.memory_space<vmem>>, vector<16x256xf32>
      tpu.vector_store %arg7[%c0_18, %c0_19], %24 {strides = array<i32>} : memref<16x256xf32, #tpu.memory_space<vmem>>, vector<16x256xf32>,
    } else {
    }
    return
  }
  func.func @transform_0(%arg0: i32, %arg1: i32) -> (i32, i32) {
    %c0_i32 = arith.constant 0 : i32
    %c0_i32_0 = arith.constant 0 : i32
    return %arg0, %c0_i32 : i32, i32
  }
  func.func @transform_1(%arg0: i32, %arg1: i32) -> (i32, i32) {
    %c0_i32 = arith.constant 0 : i32
    %c0_i32_0 = arith.constant 0 : i32
    return %c0_i32, %arg1 : i32, i32
  }
  func.func @transform_2(%arg0: i32, %arg1: i32) -> (i32, i32) {
    %c0_i32 = arith.constant 0 : i32
    %c0_i32_0 = arith.constant 0 : i32
    return %c0_i32, %arg1 : i32, i32
  }
  func.func @transform_3(%arg0: i32, %arg1: i32) -> (i32, i32) {
    %c0_i32 = arith.constant 0 : i32
    %c0_i32_0 = arith.constant 0 : i32
    return %arg1, %c0_i32 : i32, i32
  }
  func.func @transform_4(%arg0: i32, %arg1: i32) -> (i32, i32) {
    %c0_i32 = arith.constant 0 : i32
    %c0_i32_0 = arith.constant 0 : i32
    %c0_i32_1 = arith.constant 0 : i32
    return %c0_i32, %c0_i32_0 : i32, i32
  }
  func.func @transform_5(%arg0: i32, %arg1: i32) -> (i32, i32) {
    %c0_i32 = arith.constant 0 : i32
    %c0_i32_0 = arith.constant 0 : i32
    return %arg0, %c0_i32 : i32, i32
  }
}

</mosaic_0001>

<llo_original>
// kernel: tpu_custom_call.1
$region0: #{tpu_custom_call.1}
  #allocation0 [shape = 'u32[]', space=smem, size = 0x4, offset = 0x4, fixed_abs, tag = 'smem constant byte address 0x4 - core index']
  #allocation1 [shape = 'u32[144,128]{1,0:T(1,128)}', space=vmem, size = 0x12000, scoped, tag = 'internal scratch']
  #allocation2 [shape = 'f32[16,256]{1,0:T(8,128)}', space=vmem, size = 0x4000, scoped, tag = 'scratch operand']
  %s0 = inlined_call_operand.hbm [shape: f32[16,256], index: 0, kind: input, shape index: {}]
  %s1 = inlined_call_operand.hbm [shape: bf16[256,256], index: 1, kind: input, shape index: {}]
  %s2 = inlined_call_operand.vmem [shape: f32[1,256], index: 2, kind: input, shape index: {}]
  %s3 = inlined_call_operand.hbm [shape: bf16[256,256], index: 3, kind: input, shape index: {}]
  %s4 = inlined_call_operand.vmem [shape: f32[1,256], index: 4, kind: input, shape index: {}]
  %s5 = inlined_call_operand.hbm [shape: f32[16,256], index: 5, kind: output, shape index: {}]
  %s6 = sld [smem:[#allocation0]]
  $region54: #{tpu_custom_call.1} parent=0
    _
  %s8 = ssub.s32 1, %s6
  %s9 = scalar_select 0, %s8, %s6
  $region1: #{tpu_custom_call.1} parent=0
    #allocation3 [shape = 'u8[16384]{0}', space=vmem, size = 0x4000, scoped, tag = 'input window, operand 0, single buffered']
    #allocation4 [shape = 's32[1]{0}', space=sflag, size = 0x4, scoped, tag = 'scoped memory for tpu_custom_call.1']
    #allocation5 [shape = 's32[1]{0}', space=sflag, size = 0x4, scoped, tag = 'scoped memory for tpu_custom_call.1']
    #allocation6 [shape = 'u8[131072]{0}', space=vmem, size = 0x20000, scoped, tag = 'input window, operand 1, single buffered']
    #allocation7 [shape = 's32[1]{0}', space=sflag, size = 0x4, scoped, tag = 'scoped memory for tpu_custom_call.1']
    #allocation8 [shape = 'u8[131072]{0}', space=vmem, size = 0x20000, scoped, tag = 'input window, operand 3, single buffered']
    #allocation9 [shape = 'u8[16384]{0}', space=vmem, size = 0x4000, scoped, tag = 'output window, operand 0, single buffered']
    %10 = vsyncpa [#allocation4], 0
    %11 = vsyncpa [#allocation7], 0
    %12 = vsyncpa [#allocation5], 0
    // Predicated region
    $region2: #{tpu_custom_call.1} parent=1 // pred_check
      _
    $region3: #{tpu_custom_call.1} parent=1 // pred_check_branch
      %14 = sbr.rel (0) target = $region5
    $region4: #{tpu_custom_call.1} parent=1 // pred_region
      %s16 = ssub.s32 512, 512
      %17 = vsyncadd [#allocation4], %s16
      %s18 = sshll.u32 [#allocation3], 4
      %s19 = int_to_ptr.vmem [resolvable:$true] %s18
      %24 = dma.hbm_to_vmem [thread:$0]  %s0, 512, %s19, [#allocation4], 256, 256, 16
    $region5: #{tpu_custom_call.1} parent=1 // pred_fallthru
      _
    // Predicated region
    $region6: #{tpu_custom_call.1} parent=1 // pred_check
      _
    $region7: #{tpu_custom_call.1} parent=1 // pred_check_branch
      %26 = sbr.rel (0) target = $region9
    $region8: #{tpu_custom_call.1} parent=1 // pred_region
      %s28 = ssub.s32 4096, 4096
      %29 = vsyncadd [#allocation7], %s28
      %s30 = sshll.u32 [#allocation6], 4
      %s31 = int_to_ptr.vmem [resolvable:$true] %s30
      %36 = dma.hbm_to_vmem [thread:$0]  %s1, 4096, %s31, [#allocation7], 128, 128, 8
    $region9: #{tpu_custom_call.1} parent=1 // pred_fallthru
      _
    // Predicated region
    $region10: #{tpu_custom_call.1} parent=1 // pred_check
      _
    $region11: #{tpu_custom_call.1} parent=1 // pred_check_branch
      %38 = sbr.rel (0) target = $region13
    $region12: #{tpu_custom_call.1} parent=1 // pred_region
      _
    $region13: #{tpu_custom_call.1} parent=1 // pred_fallthru
      _
    // Predicated region
    $region14: #{tpu_custom_call.1} parent=1 // pred_check
      _
    $region15: #{tpu_custom_call.1} parent=1 // pred_check_branch
      %40 = sbr.rel (0) target = $region17
    $region16: #{tpu_custom_call.1} parent=1 // pred_region
      %s42 = ssub.s32 4096, 4096
      %43 = vsyncadd [#allocation7], %s42
      %s44 = sshll.u32 [#allocation8], 4
      %s45 = int_to_ptr.vmem [resolvable:$true] %s44
      %50 = dma.hbm_to_vmem [thread:$0]  %s3, 4096, %s45, [#allocation7], 128, 128, 8
    $region17: #{tpu_custom_call.1} parent=1 // pred_fallthru
      _
    // Predicated region
    $region18: #{tpu_custom_call.1} parent=1 // pred_check
      _
    $region19: #{tpu_custom_call.1} parent=1 // pred_check_branch
      %52 = sbr.rel (0) target = $region21
    $region20: #{tpu_custom_call.1} parent=1 // pred_region
      _
    $region21: #{tpu_custom_call.1} parent=1 // pred_fallthru
      _
    // Predicated region
    $region22: #{tpu_custom_call.1} parent=1 // pred_check
      _
    $region23: #{tpu_custom_call.1} parent=1 // pred_check_branch
      %54 = sbr.rel (0) target = $region25
    $region24: #{tpu_custom_call.1} parent=1 // pred_region
      %55 = dma.done [#allocation4], 512
    $region25: #{tpu_custom_call.1} parent=1 // pred_fallthru
      _
    // Predicated region
    $region26: #{tpu_custom_call.1} parent=1 // pred_check
      _
    $region27: #{tpu_custom_call.1} parent=1 // pred_check_branch
      %57 = sbr.rel (0) target = $region29
    $region28: #{tpu_custom_call.1} parent=1 // pred_region
      %58 = dma.done [#allocation7], 4096
    $region29: #{tpu_custom_call.1} parent=1 // pred_fallthru
      _
    // Predicated region
    $region30: #{tpu_custom_call.1} parent=1 // pred_check
      _
    $region31: #{tpu_custom_call.1} parent=1 // pred_check_branch
      %60 = sbr.rel (0) target = $region33
    $region32: #{tpu_custom_call.1} parent=1 // pred_region
      %61 = dma.done [#allocation7], 4096
    $region33: #{tpu_custom_call.1} parent=1 // pred_fallthru
      _
    %v62 = vld [vmem:[#allocation3] sm:$0xff]
    %v63 = vld [vmem:[#allocation3 + $0x8] sm:$0xff]
    %v64 = vld [vmem:[#allocation3 + $0x10] sm:$0xff]
    %v65 = vld [vmem:[#allocation3 + $0x18] sm:$0xff]
    %v66 = vpack.c.bf16 %v64, %v62
    %v67 = vpack.c.bf16 %v65, %v63
    %v68 = vld [vmem:[#allocation6] sm:$0xff]
    %v69 = vld [vmem:[#allocation6 + $0x8] sm:$0xff]
    %v70 = vld [vmem:[#allocation6 + $0x10] sm:$0xff]
    %v71 = vld [vmem:[#allocation6 + $0x18] sm:$0xff]
    %v72 = vld [vmem:[#allocation6 + $0x20] sm:$0xff]
    %v73 = vld [vmem:[#allocation6 + $0x28] sm:$0xff]
    %v74 = vld [vmem:[#allocation6 + $0x30] sm:$0xff]
    %v75 = vld [vmem:[#allocation6 + $0x38] sm:$0xff]
    %v76 = vld [vmem:[#allocation6 + $0x40] sm:$0xff]
    %v77 = vld [vmem:[#allocation6 + $0x48] sm:$0xff]
    %v78 = vld [vmem:[#allocation6 + $0x50] sm:$0xff]
    %v79 = vld [vmem:[#allocation6 + $0x58] sm:$0xff]
    %v80 = vld [vmem:[#allocation6 + $0x60] sm:$0xff]
    %v81 = vld [vmem:[#allocation6 + $0x68] sm:$0xff]
    %v82 = vld [vmem:[#allocation6 + $0x70] sm:$0xff]
    %v83 = vld [vmem:[#allocation6 + $0x78] sm:$0xff]
    %v84 = vld [vmem:[#allocation6 + $0x80] sm:$0xff]
    %v85 = vld [vmem:[#allocation6 + $0x88] sm:$0xff]
    %v86 = vld [vmem:[#allocation6 + $0x90] sm:$0xff]
    %v87 = vld [vmem:[#allocation6 + $0x98] sm:$0xff]
    %v88 = vld [vmem:[#allocation6 + $0xa0] sm:$0xff]
    %v89 = vld [vmem:[#allocation6 + $0xa8] sm:$0xff]
    %v90 = vld [vmem:[#allocation6 + $0xb0] sm:$0xff]
    %v91 = vld [vmem:[#allocation6 + $0xb8] sm:$0xff]
    %v92 = vld [vmem:[#allocation6 + $0xc0] sm:$0xff]
    %v93 = vld [vmem:[#allocation6 + $0xc8] sm:$0xff]
    %v94 = vld [vmem:[#allocation6 + $0xd0] sm:$0xff]
    %v95 = vld [vmem:[#allocation6 + $0xd8] sm:$0xff]
    %v96 = vld [vmem:[#allocation6 + $0xe0] sm:$0xff]
    %v97 = vld [vmem:[#allocation6 + $0xe8] sm:$0xff]
    %v98 = vld [vmem:[#allocation6 + $0xf0] sm:$0xff]
    %v99 = vld [vmem:[#allocation6 + $0xf8] sm:$0xff]
    %v100 = vld [vmem:[%s2] sm:$0x3]
    %v102 = vlaneseq
    %v103 = vshrl.u32 %v102, 7
    %v104 = vsub.s32 0, %v103
    %v105 = vrot.slane %v100, %v104
    %v106 = vlaneseq
    %v107 = vshrl.u32 %v106, 7
    %v108 = vsub.s32 1, %v107
    %v109 = vrot.slane %v100, %v108
    %v144 = vunpack.c.l.b16 %v68
    %v145 = vunpack.c.h.b16 %v68
    %v146 = vunpack.c.l.b16 %v69
    %v147 = vunpack.c.h.b16 %v69
    %v148 = vunpack.c.l.b16 %v70
    %v149 = vunpack.c.h.b16 %v70
    %v150 = vunpack.c.l.b16 %v71
    %v151 = vunpack.c.h.b16 %v71
    %v152 = vunpack.c.l.b16 %v72
    %v153 = vunpack.c.h.b16 %v72
    %v154 = vunpack.c.l.b16 %v73
    %v155 = vunpack.c.h.b16 %v73
    %v156 = vunpack.c.l.b16 %v74
    %v157 = vunpack.c.h.b16 %v74
    %v158 = vunpack.c.l.b16 %v75
    %v159 = vunpack.c.h.b16 %v75
    %v160 = vunpack.c.l.b16 %v76
    %v161 = vunpack.c.h.b16 %v76
    %v162 = vunpack.c.l.b16 %v77
    %v163 = vunpack.c.h.b16 %v77
    %v164 = vunpack.c.l.b16 %v78
    %v165 = vunpack.c.h.b16 %v78
    %v166 = vunpack.c.l.b16 %v79
    %v167 = vunpack.c.h.b16 %v79
    %v168 = vunpack.c.l.b16 %v80
    %v169 = vunpack.c.h.b16 %v80
    %v170 = vunpack.c.l.b16 %v81
    %v171 = vunpack.c.h.b16 %v81
    %v172 = vunpack.c.l.b16 %v82
    %v173 = vunpack.c.h.b16 %v82
    %v174 = vunpack.c.l.b16 %v83
    %v175 = vunpack.c.h.b16 %v83
    %v176 = vunpack.c.l.b16 %v84
    %v177 = vunpack.c.h.b16 %v84
    %v178 = vunpack.c.l.b16 %v85
    %v179 = vunpack.c.h.b16 %v85
    %v180 = vunpack.c.l.b16 %v86
    %v181 = vunpack.c.h.b16 %v86
    %v182 = vunpack.c.l.b16 %v87
    %v183 = vunpack.c.h.b16 %v87
    %v184 = vunpack.c.l.b16 %v88
    %v185 = vunpack.c.h.b16 %v88
    %v186 = vunpack.c.l.b16 %v89
    %v187 = vunpack.c.h.b16 %v89
    %v188 = vunpack.c.l.b16 %v90
    %v189 = vunpack.c.h.b16 %v90
    %v190 = vunpack.c.l.b16 %v91
    %v191 = vunpack.c.h.b16 %v91
    %v192 = vunpack.c.l.b16 %v92
    %v193 = vunpack.c.h.b16 %v92
    %v194 = vunpack.c.l.b16 %v93
    %v195 = vunpack.c.h.b16 %v93
    %v196 = vunpack.c.l.b16 %v94
    %v197 = vunpack.c.h.b16 %v94
    %v198 = vunpack.c.l.b16 %v95
    %v199 = vunpack.c.h.b16 %v95
    %v200 = vunpack.c.l.b16 %v96
    %v201 = vunpack.c.h.b16 %v96
    %v202 = vunpack.c.l.b16 %v97
    %v203 = vunpack.c.h.b16 %v97
    %v204 = vunpack.c.l.b16 %v98
    %v205 = vunpack.c.h.b16 %v98
    %v206 = vunpack.c.l.b16 %v99
    %v207 = vunpack.c.h.b16 %v99
    %v208 = vpack.c.b16 %v146, %v144
    %v209 = vpack.c.b16 %v147, %v145
    %v210 = vpack.c.b16 %v150, %v148
    %v211 = vpack.c.b16 %v151, %v149
    %v212 = vpack.c.b16 %v154, %v152
    %v213 = vpack.c.b16 %v155, %v153
    %v214 = vpack.c.b16 %v158, %v156
    %v215 = vpack.c.b16 %v159, %v157
    %v216 = vpack.c.b16 %v162, %v160
    %v217 = vpack.c.b16 %v163, %v161
    %v218 = vpack.c.b16 %v166, %v164
    %v219 = vpack.c.b16 %v167, %v165
    %v220 = vpack.c.b16 %v170, %v168
    %v221 = vpack.c.b16 %v171, %v169
    %v222 = vpack.c.b16 %v174, %v172
    %v223 = vpack.c.b16 %v175, %v173
    %v224 = vpack.c.b16 %v178, %v176
    %v225 = vpack.c.b16 %v179, %v177
    %v226 = vpack.c.b16 %v182, %v180
    %v227 = vpack.c.b16 %v183, %v181
    %v228 = vpack.c.b16 %v186, %v184
    %v229 = vpack.c.b16 %v187, %v185
    %v230 = vpack.c.b16 %v190, %v188
    %v231 = vpack.c.b16 %v191, %v189
    %v232 = vpack.c.b16 %v194, %v192
    %v233 = vpack.c.b16 %v195, %v193
    %v234 = vpack.c.b16 %v198, %v196
    %v235 = vpack.c.b16 %v199, %v197
    %v236 = vpack.c.b16 %v202, %v200
    %v237 = vpack.c.b16 %v203, %v201
    %v238 = vpack.c.b16 %v206, %v204
    %v239 = vpack.c.b16 %v207, %v205
    %272 = vmatprep.subr.bf16.mxu0 %v209
    %273 = vmatpush1.bf16.msra.mxu0 %v208
    %274 = vmatprep.subr.bf16.mxu0 %v211
    %275 = vmatpush1.bf16.msra.mxu0 %v210
    %276 = vmatprep.subr.bf16.mxu0 %v213
    %277 = vmatpush1.bf16.msra.mxu0 %v212
    %278 = vmatprep.subr.bf16.mxu0 %v215
    %279 = vmatpush1.bf16.msra.mxu0 %v214
    %280 = vmatprep.subr.bf16.mxu0 %v217
    %281 = vmatpush1.bf16.msra.mxu0 %v216
    %282 = vmatprep.subr.bf16.mxu0 %v219
    %283 = vmatpush1.bf16.msra.mxu0 %v218
    %284 = vmatprep.subr.bf16.mxu0 %v221
    %285 = vmatpush1.bf16.msra.mxu0 %v220
    %286 = vmatprep.subr.bf16.mxu0 %v223
    %287 = vmatpush1.bf16.msra.mxu0 %v222
    %288 = vmatprep.subr.bf16.mxu0 %v225
    %289 = vmatpush1.bf16.msra.mxu0 %v224
    %290 = vmatprep.subr.bf16.mxu0 %v227
    %291 = vmatpush1.bf16.msra.mxu0 %v226
    %292 = vmatprep.subr.bf16.mxu0 %v229
    %293 = vmatpush1.bf16.msra.mxu0 %v228
    %294 = vmatprep.subr.bf16.mxu0 %v231
    %295 = vmatpush1.bf16.msra.mxu0 %v230
    %296 = vmatprep.subr.bf16.mxu0 %v233
    %297 = vmatpush1.bf16.msra.mxu0 %v232
    %298 = vmatprep.subr.bf16.mxu0 %v235
    %299 = vmatpush1.bf16.msra.mxu0 %v234
    %300 = vmatprep.subr.bf16.mxu0 %v237
    %301 = vmatpush1.bf16.msra.mxu0 %v236
    %302 = vmatprep.subr.bf16.mxu0 %v239
    %303 = vmatpush1.bf16.msra.mxu0 %v238
    %304 = vmatprep.mubr.bf16.mxu0 %v67
    %305 = vmatmul.mubr.bf16.gmra.mrb[0].mxu0 %v66
    %v306 = vpop.f32.mrb[0].mxu0
    %v307 = vadd.f32 %v105, %v306
    %v308 = vpop.f32.mrb[0].mxu0
    %v309 = vadd.f32 %v109, %v308
    %v310 = vpop.f32.mrb[0].mxu0
    %v311 = vadd.f32 %v105, %v310
    %v312 = vpop.f32.mrb[0].mxu0
    %v313 = vadd.f32 %v109, %v312
    %314 = vdwg.mxu0
    %v315 = vmax.f32 %v307, 0.0
    %v316 = vmax.f32 %v309, 0.0
    %v317 = vmax.f32 %v311, 0.0
    %v318 = vmax.f32 %v313, 0.0
    %v319 = vpack.c.bf16 %v317, %v315
    %v320 = vpack.c.bf16 %v318, %v316
    %v321 = vld [vmem:[#allocation8] sm:$0xff]
    %v322 = vld [vmem:[#allocation8 + $0x8] sm:$0xff]
    %v323 = vld [vmem:[#allocation8 + $0x10] sm:$0xff]
    %v324 = vld [vmem:[#allocation8 + $0x18] sm:$0xff]
    %v325 = vld [vmem:[#allocation8 + $0x20] sm:$0xff]
    %v326 = vld [vmem:[#allocation8 + $0x28] sm:$0xff]
    %v327 = vld [vmem:[#allocation8 + $0x30] sm:$0xff]
    %v328 = vld [vmem:[#allocation8 + $0x38] sm:$0xff]
    %v329 = vld [vmem:[#allocation8 + $0x40] sm:$0xff]
    %v330 = vld [vmem:[#allocation8 + $0x48] sm:$0xff]
    %v331 = vld [vmem:[#allocation8 + $0x50] sm:$0xff]
    %v332 = vld [vmem:[#allocation8 + $0x58] sm:$0xff]
    %v333 = vld [vmem:[#allocation8 + $0x60] sm:$0xff]
    %v334 = vld [vmem:[#allocation8 + $0x68] sm:$0xff]
    %v335 = vld [vmem:[#allocation8 + $0x70] sm:$0xff]
    %v336 = vld [vmem:[#allocation8 + $0x78] sm:$0xff]
    %v337 = vld [vmem:[#allocation8 + $0x80] sm:$0xff]
    %v338 = vld [vmem:[#allocation8 + $0x88] sm:$0xff]
    %v339 = vld [vmem:[#allocation8 + $0x90] sm:$0xff]
    %v340 = vld [vmem:[#allocation8 + $0x98] sm:$0xff]
    %v341 = vld [vmem:[#allocation8 + $0xa0] sm:$0xff]
    %v342 = vld [vmem:[#allocation8 + $0xa8] sm:$0xff]
    %v343 = vld [vmem:[#allocation8 + $0xb0] sm:$0xff]
    %v344 = vld [vmem:[#allocation8 + $0xb8] sm:$0xff]
    %v345 = vld [vmem:[#allocation8 + $0xc0] sm:$0xff]
    %v346 = vld [vmem:[#allocation8 + $0xc8] sm:$0xff]
    %v347 = vld [vmem:[#allocation8 + $0xd0] sm:$0xff]
    %v348 = vld [vmem:[#allocation8 + $0xd8] sm:$0xff]
    %v349 = vld [vmem:[#allocation8 + $0xe0] sm:$0xff]
    %v350 = vld [vmem:[#allocation8 + $0xe8] sm:$0xff]
    %v351 = vld [vmem:[#allocation8 + $0xf0] sm:$0xff]
    %v352 = vld [vmem:[#allocation8 + $0xf8] sm:$0xff]
    %v385 = vunpack.c.l.b16 %v321
    %v386 = vunpack.c.h.b16 %v321
    %v387 = vunpack.c.l.b16 %v322
    %v388 = vunpack.c.h.b16 %v322
    %v389 = vunpack.c.l.b16 %v323
    %v390 = vunpack.c.h.b16 %v323
    %v391 = vunpack.c.l.b16 %v324
    %v392 = vunpack.c.h.b16 %v324
    %v393 = vunpack.c.l.b16 %v325
    %v394 = vunpack.c.h.b16 %v325
    %v395 = vunpack.c.l.b16 %v326
    %v396 = vunpack.c.h.b16 %v326
    %v397 = vunpack.c.l.b16 %v327
    %v398 = vunpack.c.h.b16 %v327
    %v399 = vunpack.c.l.b16 %v328
    %v400 = vunpack.c.h.b16 %v328
    %v401 = vunpack.c.l.b16 %v329
    %v402 = vunpack.c.h.b16 %v329
    %v403 = vunpack.c.l.b16 %v330
    %v404 = vunpack.c.h.b16 %v330
    %v405 = vunpack.c.l.b16 %v331
    %v406 = vunpack.c.h.b16 %v331
    %v407 = vunpack.c.l.b16 %v332
    %v408 = vunpack.c.h.b16 %v332
    %v409 = vunpack.c.l.b16 %v333
    %v410 = vunpack.c.h.b16 %v333
    %v411 = vunpack.c.l.b16 %v334
    %v412 = vunpack.c.h.b16 %v334
    %v413 = vunpack.c.l.b16 %v335
    %v414 = vunpack.c.h.b16 %v335
    %v415 = vunpack.c.l.b16 %v336
    %v416 = vunpack.c.h.b16 %v336
    %v417 = vunpack.c.l.b16 %v337
    %v418 = vunpack.c.h.b16 %v337
    %v419 = vunpack.c.l.b16 %v338
    %v420 = vunpack.c.h.b16 %v338
    %v421 = vunpack.c.l.b16 %v339
    %v422 = vunpack.c.h.b16 %v339
    %v423 = vunpack.c.l.b16 %v340
    %v424 = vunpack.c.h.b16 %v340
    %v425 = vunpack.c.l.b16 %v341
    %v426 = vunpack.c.h.b16 %v341
    %v427 = vunpack.c.l.b16 %v342
    %v428 = vunpack.c.h.b16 %v342
    %v429 = vunpack.c.l.b16 %v343
    %v430 = vunpack.c.h.b16 %v343
    %v431 = vunpack.c.l.b16 %v344
    %v432 = vunpack.c.h.b16 %v344
    %v433 = vunpack.c.l.b16 %v345
    %v434 = vunpack.c.h.b16 %v345
    %v435 = vunpack.c.l.b16 %v346
    %v436 = vunpack.c.h.b16 %v346
    %v437 = vunpack.c.l.b16 %v347
    %v438 = vunpack.c.h.b16 %v347
    %v439 = vunpack.c.l.b16 %v348
    %v440 = vunpack.c.h.b16 %v348
    %v441 = vunpack.c.l.b16 %v349
    %v442 = vunpack.c.h.b16 %v349
    %v443 = vunpack.c.l.b16 %v350
    %v444 = vunpack.c.h.b16 %v350
    %v445 = vunpack.c.l.b16 %v351
    %v446 = vunpack.c.h.b16 %v351
    %v447 = vunpack.c.l.b16 %v352
    %v448 = vunpack.c.h.b16 %v352
    %v449 = vpack.c.b16 %v387, %v385
    %v450 = vpack.c.b16 %v388, %v386
    %v451 = vpack.c.b16 %v391, %v389
    %v452 = vpack.c.b16 %v392, %v390
    %v453 = vpack.c.b16 %v395, %v393
    %v454 = vpack.c.b16 %v396, %v394
    %v455 = vpack.c.b16 %v399, %v397
    %v456 = vpack.c.b16 %v400, %v398
    %v457 = vpack.c.b16 %v403, %v401
    %v458 = vpack.c.b16 %v404, %v402
    %v459 = vpack.c.b16 %v407, %v405
    %v460 = vpack.c.b16 %v408, %v406
    %v461 = vpack.c.b16 %v411, %v409
    %v462 = vpack.c.b16 %v412, %v410
    %v463 = vpack.c.b16 %v415, %v413
    %v464 = vpack.c.b16 %v416, %v414
    %v465 = vpack.c.b16 %v419, %v417
    %v466 = vpack.c.b16 %v420, %v418
    %v467 = vpack.c.b16 %v423, %v421
    %v468 = vpack.c.b16 %v424, %v422
    %v469 = vpack.c.b16 %v427, %v425
    %v470 = vpack.c.b16 %v428, %v426
    %v471 = vpack.c.b16 %v431, %v429
    %v472 = vpack.c.b16 %v432, %v430
    %v473 = vpack.c.b16 %v435, %v433
    %v474 = vpack.c.b16 %v436, %v434
    %v475 = vpack.c.b16 %v439, %v437
    %v476 = vpack.c.b16 %v440, %v438
    %v477 = vpack.c.b16 %v443, %v441
    %v478 = vpack.c.b16 %v444, %v442
    %v479 = vpack.c.b16 %v447, %v445
    %v480 = vpack.c.b16 %v448, %v446
    %513 = vmatprep.subr.bf16.mxu0 %v450
    %514 = vmatpush1.bf16.msra.mxu0 %v449
    %515 = vmatprep.subr.bf16.mxu0 %v452
    %516 = vmatpush1.bf16.msra.mxu0 %v451
    %517 = vmatprep.subr.bf16.mxu0 %v454
    %518 = vmatpush1.bf16.msra.mxu0 %v453
    %519 = vmatprep.subr.bf16.mxu0 %v456
    %520 = vmatpush1.bf16.msra.mxu0 %v455
    %521 = vmatprep.subr.bf16.mxu0 %v458
    %522 = vmatpush1.bf16.msra.mxu0 %v457
    %523 = vmatprep.subr.bf16.mxu0 %v460
    %524 = vmatpush1.bf16.msra.mxu0 %v459
    %525 = vmatprep.subr.bf16.mxu0 %v462
    %526 = vmatpush1.bf16.msra.mxu0 %v461
    %527 = vmatprep.subr.bf16.mxu0 %v464
    %528 = vmatpush1.bf16.msra.mxu0 %v463
    %529 = vmatprep.subr.bf16.mxu0 %v466
    %530 = vmatpush1.bf16.msra.mxu0 %v465
    %531 = vmatprep.subr.bf16.mxu0 %v468
    %532 = vmatpush1.bf16.msra.mxu0 %v467
    %533 = vmatprep.subr.bf16.mxu0 %v470
    %534 = vmatpush1.bf16.msra.mxu0 %v469
    %535 = vmatprep.subr.bf16.mxu0 %v472
    %536 = vmatpush1.bf16.msra.mxu0 %v471
    %537 = vmatprep.subr.bf16.mxu0 %v474
    %538 = vmatpush1.bf16.msra.mxu0 %v473
    %539 = vmatprep.subr.bf16.mxu0 %v476
    %540 = vmatpush1.bf16.msra.mxu0 %v475
    %541 = vmatprep.subr.bf16.mxu0 %v478
    %542 = vmatpush1.bf16.msra.mxu0 %v477
    %543 = vmatprep.subr.bf16.mxu0 %v480
    %544 = vmatpush1.bf16.msra.mxu0 %v479
    %545 = vmatprep.mubr.bf16.mxu0 %v320
    %546 = vmatmul.mubr.bf16.gmra.mrb[0].mxu0 %v319
    %v547 = vpop.f32.mrb[0].mxu0
    %v548 = vadd.f32 0.0, %v547
    %v549 = vpop.f32.mrb[0].mxu0
    %v550 = vadd.f32 0.0, %v549
    %v551 = vpop.f32.mrb[0].mxu0
    %v552 = vadd.f32 0.0, %v551
    %v553 = vpop.f32.mrb[0].mxu0
    %v554 = vadd.f32 0.0, %v553
    %555 = vdwg.mxu0
    %p556 = scmp.eq.s32.totalorder 0, 0
    // Predicated region
    $region34: #{tpu_custom_call.1} parent=1 // pred_check
      %p557 = pneg %p556
    $region35: #{tpu_custom_call.1} parent=1 // pred_check_branch
      %559 = sbr.rel (%p557) target = $region37
    $region36: #{tpu_custom_call.1} parent=1 // pred_region
      %560 = vst [vmem:[#allocation2] sm:$0xff] %v548
      %561 = vst [vmem:[#allocation2 + $0x8] sm:$0xff] %v550
      %562 = vst [vmem:[#allocation2 + $0x10] sm:$0xff] %v552
      %563 = vst [vmem:[#allocation2 + $0x18] sm:$0xff] %v554
    $region37: #{tpu_custom_call.1} parent=1 // pred_fallthru
      _
    %p564 = scmp.gt.s32.totalorder 0, 0
    // Predicated region
    $region38: #{tpu_custom_call.1} parent=1 // pred_check
      %p565 = pneg %p564
    $region39: #{tpu_custom_call.1} parent=1 // pred_check_branch
      %567 = sbr.rel (%p565) target = $region41
    $region40: #{tpu_custom_call.1} parent=1 // pred_region
      %v568 = vld [vmem:[#allocation2] sm:$0xff]
      %v569 = vld [vmem:[#allocation2 + $0x8] sm:$0xff]
      %v570 = vld [vmem:[#allocation2 + $0x10] sm:$0xff]
      %v571 = vld [vmem:[#allocation2 + $0x18] sm:$0xff]
      %v572 = vadd.f32 %v568, %v548
      %v573 = vadd.f32 %v569, %v550
      %v574 = vadd.f32 %v570, %v552
      %v575 = vadd.f32 %v571, %v554
      %576 = vst [vmem:[#allocation2] sm:$0xff] %v572
      %577 = vst [vmem:[#allocation2 + $0x8] sm:$0xff] %v573
      %578 = vst [vmem:[#allocation2 + $0x10] sm:$0xff] %v574
      %579 = vst [vmem:[#allocation2 + $0x18] sm:$0xff] %v575
    $region41: #{tpu_custom_call.1} parent=1 // pred_fallthru
      _
    // Predicated region
    $region42: #{tpu_custom_call.1} parent=1 // pred_check
      %p580 = pneg %p556
    $region43: #{tpu_custom_call.1} parent=1 // pred_check_branch
      %582 = sbr.rel (%p580) target = $region45
    $region44: #{tpu_custom_call.1} parent=1 // pred_region
      %v583 = vld [vmem:[#allocation2] sm:$0xff]
      %v584 = vld [vmem:[#allocation2 + $0x8] sm:$0xff]
      %v585 = vld [vmem:[#allocation2 + $0x10] sm:$0xff]
      %v586 = vld [vmem:[#allocation2 + $0x18] sm:$0xff]
      %v587 = vld [vmem:[%s4] sm:$0x3]
      %v589 = vlaneseq
      %v590 = vshrl.u32 %v589, 7
      %v591 = vsub.s32 0, %v590
      %v592 = vrot.slane %v587, %v591
      %v593 = vlaneseq
      %v594 = vshrl.u32 %v593, 7
      %v595 = vsub.s32 1, %v594
      %v596 = vrot.slane %v587, %v595
      %v599 = vadd.f32 %v583, %v592
      %v600 = vadd.f32 %v584, %v596
      %v601 = vadd.f32 %v585, %v592
      %v602 = vadd.f32 %v586, %v596
      %603 = vst [vmem:[#allocation9] sm:$0xff] %v599
      %604 = vst [vmem:[#allocation9 + $0x8] sm:$0xff] %v600
      %605 = vst [vmem:[#allocation9 + $0x10] sm:$0xff] %v601
      %606 = vst [vmem:[#allocation9 + $0x18] sm:$0xff] %v602
    $region45: #{tpu_custom_call.1} parent=1 // pred_fallthru
      _
    // Predicated region
    $region46: #{tpu_custom_call.1} parent=1 // pred_check
      _
    $region47: #{tpu_custom_call.1} parent=1 // pred_check_branch
      %608 = sbr.rel (0) target = $region49
    $region48: #{tpu_custom_call.1} parent=1 // pred_region
      %s610 = ssub.s32 512, 512
      %611 = vsyncadd [#allocation5], %s610
      %s612 = sshll.u32 [#allocation9], 4
      %s613 = int_to_ptr.vmem [resolvable:$true] %s612
      %618 = dma.vmem_to_hbm [thread:$0]  %s613, 512, %s5, [#allocation5], 256, 256, 16
    $region49: #{tpu_custom_call.1} parent=1 // pred_fallthru
      _
    // Predicated region
    $region50: #{tpu_custom_call.1} parent=1 // pred_check
      _
    $region51: #{tpu_custom_call.1} parent=1 // pred_check_branch
      %620 = sbr.rel (0) target = $region53
    $region52: #{tpu_custom_call.1} parent=1 // pred_region
      %621 = dma.done [#allocation5], 512
    $region53: #{tpu_custom_call.1} parent=1 // pred_fallthru
      _
    %622 = vsyncpa [#allocation4], 1
    %623 = vsyncpa [#allocation7], 1
    %624 = vsyncpa [#allocation5], 1

</llo_original>
